<compile_context>
chip_gen: v7x
topology: tpu7x:2x2x1
jax: 0.10.0
libtpu: 0.0.40
codegen_flags: <defaults>
</compile_context>

<pallas_src>
import jax
import jax.numpy as jnp
from jax.experimental import pallas as pl
from jax.experimental.pallas import tpu as pltpu


def _sum_pool_fc_kernel(f_ref, w_ref, b_ref, o_ref):
    # f_ref: (Bt, F, D) f32   w_ref: (D, N) f32 (pre-scaled by 1/F)
    # b_ref: (1, N) f32       o_ref: (Bt, N) f32
    pooled = jnp.sum(f_ref[...], axis=1)                       # (Bt, D)  XLU/VPU
    acc = jnp.dot(pooled, w_ref[...],                           # MXU, f32 acc
                  preferred_element_type=jnp.float32)
    o_ref[...] = (acc + b_ref[...]).astype(o_ref.dtype)


# Keep the whole-array-resident path well under the scoped-VMEM default on the
# smallest-VMEM generation (v7x: 32 MiB scoped / 64 MiB physical).
_GRIDLESS_FEATURES_BYTES_LIMIT = 8 << 20  # 8 MiB


def visual_model_less_complex_forward(features, w_t_scaled, bias):
    """features: (B, F, 512) f32; w_t_scaled: (512, N) f32 == weight.T / F;
    bias: (N,) f32.  Returns (B, N) f32 == Linear(features.mean(axis=1))."""
    B, F, D = features.shape
    N = w_t_scaled.shape[1]
    b2d = bias.reshape(1, N)

    cost = pl.CostEstimate(
        flops=2 * B * D * N + B * F * D,
        transcendentals=0,
        bytes_accessed=(features.size * features.dtype.itemsize
                        + w_t_scaled.size * w_t_scaled.dtype.itemsize
                        + b2d.size * b2d.dtype.itemsize
                        + B * N * 4),
    )

    feat_bytes = features.size * features.dtype.itemsize
    bt = 8  # sublane-aligned batch tile for the large-B path

    if feat_bytes <= _GRIDLESS_FEATURES_BYTES_LIMIT or B % bt != 0:
        # Launch/latency-bound regime: single step, whole arrays in VMEM,
        # no grid / pipeline machinery (it would only add per-step overhead).
        return pl.pallas_call(
            _sum_pool_fc_kernel,
            out_shape=jax.ShapeDtypeStruct((B, N), features.dtype),
            in_specs=[
                pl.BlockSpec(memory_space=pltpu.MemorySpace.VMEM),
                pl.BlockSpec(memory_space=pltpu.MemorySpace.VMEM),
                pl.BlockSpec(memory_space=pltpu.MemorySpace.VMEM),
            ],
            out_specs=pl.BlockSpec(memory_space=pltpu.MemorySpace.VMEM),
            cost_estimate=cost,
        )(features, w_t_scaled, b2d)

    # Scalability guard: features too large to sit resident — tile over B
    # (parallel axis, shardable across v7x's 2 TensorCores), weight/bias
    # replicated per tile.
    return pl.pallas_call(
        _sum_pool_fc_kernel,
        out_shape=jax.ShapeDtypeStruct((B, N), features.dtype),
        grid_spec=pltpu.PrefetchScalarGridSpec(
            num_scalar_prefetch=0,
            grid=(B // bt,),
            in_specs=[
                pl.BlockSpec((bt, F, D), lambda i: (i, 0, 0)),
                pl.BlockSpec((D, N), lambda i: (0, 0)),
                pl.BlockSpec((1, N), lambda i: (0, 0)),
            ],
            out_specs=pl.BlockSpec((bt, N), lambda i: (i, 0)),
        ),
        compiler_params=pltpu.CompilerParams(
            dimension_semantics=("parallel",)),
        cost_estimate=cost,
    )(features, w_t_scaled, b2d)


if __name__ == "__main__":
    # Small shapes consistent with the module: batch=2, num_frames=4,
    # resnet18 feature dim=512 (fixed by Linear(512, hidden)), hidden_size=256.
    batch, num_frames, feat_dim, hidden = 2, 4, 512, 256

    key = jax.random.PRNGKey(0)
    kf, kw, kb = jax.random.split(key, 3)

    # TODO(synk): resnet18 IMAGENET1K_V1 backbone (frozen feature extractor) is
    # not translatable in-script; we generate its (B, F, 512) output features
    # directly.
    features = jax.random.normal(kf, (batch, num_frames, feat_dim), jnp.float32)

    # nn.Linear-style init: uniform(-1/sqrt(K), 1/sqrt(K))
    bound = 1.0 / (feat_dim ** 0.5)
    weight = jax.random.uniform(kw, (hidden, feat_dim), jnp.float32, -bound, bound)
    bias = jax.random.uniform(kb, (hidden,), jnp.float32, -bound, bound)

    # Frozen weight -> fold the 1/F mean scale in offline (one-time transform),
    # kernel then only does sum + dot.  Stored f32 (bf16 trick reverted).
    w_t_scaled = (weight.T / num_frames).astype(jnp.float32)

    out = visual_model_less_complex_forward(features, w_t_scaled, bias)
    out = jax.block_until_ready(out)

    # Full-precision reference.
    ref = features.mean(axis=1) @ weight.T + bias
    assert out.shape == (batch, hidden)
    assert jnp.allclose(out, ref, atol=1e-4, rtol=1e-4), float(jnp.max(jnp.abs(out - ref)))

    print("KERNEL_OK")
</pallas_src>

<mosaic_0001>
module attributes {stable_mosaic.version = 11 : i64} {
  func.func @_sum_pool_fc_kernel(%arg0: memref<2x4x512xf32, #tpu.memory_space<vmem>>, %arg1: memref<512x256xf32, #tpu.memory_space<vmem>>, %arg2: memref<1x256xf32, #tpu.memory_space<vmem>>, %arg3: memref<2x256xf32, #tpu.memory_space<vmem>>) attributes {dimension_semantics = [], scalar_prefetch = 0 : i64, scratch_operands = 0 : i64, tpu.core_type = #tpu.core_type<tc>} {
    %c0 = arith.constant 0 : index
    %c0_0 = arith.constant 0 : index
    %c0_1 = arith.constant 0 : index
    %0 = vector.load %arg0[%c0, %c0_0, %c0_1] : memref<2x4x512xf32, #tpu.memory_space<vmem>>, vector<2x4x512xf32>
    %cst = arith.constant dense<0.000000e+00> : vector<2x512xf32>
    %1 = vector.multi_reduction <add>, %0, %cst [1] : vector<2x4x512xf32> to vector<2x512xf32>
    %c0_2 = arith.constant 0 : index
    %c0_3 = arith.constant 0 : index
    %2 = vector.load %arg1[%c0_2, %c0_3] : memref<512x256xf32, #tpu.memory_space<vmem>>, vector<512x256xf32>
    %cst_4 = arith.constant dense<0.000000e+00> : vector<2x256xf32>
    %3 = tpu.matmul %1, %2, %cst_4 {dimension_numbers = #tpu.dot_dimension_numbers<[1], [0], [0], [1], [0, 0, 1, 1], [], []>} : vector<2x512xf32>, vector<512x256xf32>, vector<2x256xf32> -> vector<2x256xf32>
    %c0_5 = arith.constant 0 : index
    %c0_6 = arith.constant 0 : index
    %4 = vector.load %arg2[%c0_5, %c0_6] : memref<1x256xf32, #tpu.memory_space<vmem>>, vector<1x256xf32>
    %5 = vector.broadcast %4 : vector<1x256xf32> to vector<2x256xf32>
    %6 = arith.addf %3, %5 : vector<2x256xf32>
    %c0_7 = arith.constant 0 : index
    %c0_8 = arith.constant 0 : index
    %7 = vector.load %arg3[%c0_7, %c0_8] : memref<2x256xf32, #tpu.memory_space<vmem>>, vector<2x256xf32>
    tpu.vector_store %arg3[%c0_7, %c0_8], %6 {strides = array<i32>} : memref<2x256xf32, #tpu.memory_space<vmem>>, vector<2x256xf32>,
    return
  }
}

</mosaic_0001>

<llo_original>
// kernel: tpu_custom_call.1
$region0: #{tpu_custom_call.1}
  #allocation0 [shape = 'u32[]', space=smem, size = 0x4, offset = 0x4, fixed_abs, tag = 'smem constant byte address 0x4 - core index']
  #allocation1 [shape = 'u32[144,128]{1,0:T(1,128)}', space=vmem, size = 0x12000, scoped, tag = 'internal scratch']
  %s0 = inlined_call_operand.hbm [shape: f32[2,4,512], index: 0, kind: input, shape index: {}]
  %s1 = inlined_call_operand.hbm [shape: f32[512,256], index: 1, kind: input, shape index: {}]
  %s2 = inlined_call_operand.vmem [shape: f32[1,256], index: 2, kind: input, shape index: {}]
  %s3 = inlined_call_operand.hbm [shape: f32[2,256], index: 3, kind: output, shape index: {}]
  %s4 = sld [smem:[#allocation0]]
  $region30: #{tpu_custom_call.1} parent=0
    _
  %s6 = ssub.s32 1, %s4
  %s7 = scalar_select 0, %s6, %s4
  $region1: #{tpu_custom_call.1} parent=0
    #allocation2 [shape = 'u8[16384]{0}', space=vmem, size = 0x4000, scoped, tag = 'input window, operand 0, single buffered']
    #allocation3 [shape = 's32[1]{0}', space=sflag, size = 0x4, scoped, tag = 'scoped memory for tpu_custom_call.1']
    #allocation4 [shape = 's32[1]{0}', space=sflag, size = 0x4, scoped, tag = 'scoped memory for tpu_custom_call.1']
    #allocation5 [shape = 'u8[524288]{0}', space=vmem, size = 0x80000, scoped, tag = 'input window, operand 1, single buffered']
    #allocation6 [shape = 's32[1]{0}', space=sflag, size = 0x4, scoped, tag = 'scoped memory for tpu_custom_call.1']
    #allocation7 [shape = 'u8[2048]{0}', space=vmem, size = 0x800, scoped, tag = 'output window, operand 0, single buffered']
    %8 = vsyncpa [#allocation3], 0
    %9 = vsyncpa [#allocation6], 0
    %10 = vsyncpa [#allocation4], 0
    // Predicated region
    $region2: #{tpu_custom_call.1} parent=1 // pred_check
      _
    $region3: #{tpu_custom_call.1} parent=1 // pred_check_branch
      %12 = sbr.rel (0) target = $region5
    $region4: #{tpu_custom_call.1} parent=1 // pred_region
      %s14 = ssub.s32 512, 512
      %15 = vsyncadd [#allocation3], %s14
      %s16 = sshll.u32 [#allocation2], 4
      %s17 = int_to_ptr.vmem [resolvable:$true] %s16
      %22 = dma.hbm_to_vmem [thread:$0]  %s0, 512, %s17, [#allocation3], 256, 256, 16
    $region5: #{tpu_custom_call.1} parent=1 // pred_fallthru
      _
    // Predicated region
    $region6: #{tpu_custom_call.1} parent=1 // pred_check
      _
    $region7: #{tpu_custom_call.1} parent=1 // pred_check_branch
      %24 = sbr.rel (0) target = $region9
    $region8: #{tpu_custom_call.1} parent=1 // pred_region
      %s26 = ssub.s32 16384, 16384
      %27 = vsyncadd [#allocation6], %s26
      %s28 = sshll.u32 [#allocation5], 4
      %s29 = int_to_ptr.vmem [resolvable:$true] %s28
      %34 = dma.hbm_to_vmem [thread:$0]  %s1, 16384, %s29, [#allocation6], 256, 256, 16
    $region9: #{tpu_custom_call.1} parent=1 // pred_fallthru
      _
    // Predicated region
    $region10: #{tpu_custom_call.1} parent=1 // pred_check
      _
    $region11: #{tpu_custom_call.1} parent=1 // pred_check_branch
      %36 = sbr.rel (0) target = $region13
    $region12: #{tpu_custom_call.1} parent=1 // pred_region
      _
    $region13: #{tpu_custom_call.1} parent=1 // pred_fallthru
      _
    // Predicated region
    $region14: #{tpu_custom_call.1} parent=1 // pred_check
      _
    $region15: #{tpu_custom_call.1} parent=1 // pred_check_branch
      %38 = sbr.rel (0) target = $region17
    $region16: #{tpu_custom_call.1} parent=1 // pred_region
      %39 = dma.done [#allocation3], 512
    $region17: #{tpu_custom_call.1} parent=1 // pred_fallthru
      _
    // Predicated region
    $region18: #{tpu_custom_call.1} parent=1 // pred_check
      _
    $region19: #{tpu_custom_call.1} parent=1 // pred_check_branch
      %41 = sbr.rel (0) target = $region21
    $region20: #{tpu_custom_call.1} parent=1 // pred_region
      %42 = dma.done [#allocation6], 16384
    $region21: #{tpu_custom_call.1} parent=1 // pred_fallthru
      _
    %v43 = vld [vmem:[#allocation2] sm:$0xff]
    %v44 = vld [vmem:[#allocation2 + $0x8] sm:$0xff]
    %v45 = vld [vmem:[#allocation2 + $0x10] sm:$0xff]
    %v46 = vld [vmem:[#allocation2 + $0x18] sm:$0xff]
    %v51 = vcombine.high %v43, %v43
    %v52 = vcombine.high %v44, %v44
    %v53 = vcombine.high %v45, %v45
    %v54 = vcombine.high %v46, %v46
    %vm59 = vcmask 1043456
    %v60 = vsel %vm59, %v43, 0.0
    %v61 = vrot.slane %v60, 4
    %v62 = vadd.f32 %v60, %v61
    %v63 = vrot.slane %v62, 2
    %v64 = vadd.f32 %v62, %v63
    %v65 = vrot.slane %v64, 1
    %v66 = vadd.f32 %v64, %v65
    %v67 = vsel %vm59, %v51, 0.0
    %v68 = vrot.slane %v67, 4
    %v69 = vadd.f32 %v67, %v68
    %v70 = vrot.slane %v69, 2
    %v71 = vadd.f32 %v69, %v70
    %v72 = vrot.slane %v71, 1
    %v73 = vadd.f32 %v71, %v72
    %v74 = vsel %vm59, %v44, 0.0
    %v75 = vrot.slane %v74, 4
    %v76 = vadd.f32 %v74, %v75
    %v77 = vrot.slane %v76, 2
    %v78 = vadd.f32 %v76, %v77
    %v79 = vrot.slane %v78, 1
    %v80 = vadd.f32 %v78, %v79
    %v81 = vsel %vm59, %v52, 0.0
    %v82 = vrot.slane %v81, 4
    %v83 = vadd.f32 %v81, %v82
    %v84 = vrot.slane %v83, 2
    %v85 = vadd.f32 %v83, %v84
    %v86 = vrot.slane %v85, 1
    %v87 = vadd.f32 %v85, %v86
    %v88 = vsel %vm59, %v45, 0.0
    %v89 = vrot.slane %v88, 4
    %v90 = vadd.f32 %v88, %v89
    %v91 = vrot.slane %v90, 2
    %v92 = vadd.f32 %v90, %v91
    %v93 = vrot.slane %v92, 1
    %v94 = vadd.f32 %v92, %v93
    %v95 = vsel %vm59, %v53, 0.0
    %v96 = vrot.slane %v95, 4
    %v97 = vadd.f32 %v95, %v96
    %v98 = vrot.slane %v97, 2
    %v99 = vadd.f32 %v97, %v98
    %v100 = vrot.slane %v99, 1
    %v101 = vadd.f32 %v99, %v100
    %v102 = vsel %vm59, %v46, 0.0
    %v103 = vrot.slane %v102, 4
    %v104 = vadd.f32 %v102, %v103
    %v105 = vrot.slane %v104, 2
    %v106 = vadd.f32 %v104, %v105
    %v107 = vrot.slane %v106, 1
    %v108 = vadd.f32 %v106, %v107
    %v109 = vsel %vm59, %v54, 0.0
    %v110 = vrot.slane %v109, 4
    %v111 = vadd.f32 %v109, %v110
    %v112 = vrot.slane %v111, 2
    %v113 = vadd.f32 %v111, %v112
    %v114 = vrot.slane %v113, 1
    %v115 = vadd.f32 %v113, %v114
    %v116 = vld [vmem:[#allocation5] sm:$0xff]
    %v117 = vld [vmem:[#allocation5 + $0x8] sm:$0xff]
    %v118 = vld [vmem:[#allocation5 + $0x10] sm:$0xff]
    %v119 = vld [vmem:[#allocation5 + $0x18] sm:$0xff]
    %v120 = vld [vmem:[#allocation5 + $0x20] sm:$0xff]
    %v121 = vld [vmem:[#allocation5 + $0x28] sm:$0xff]
    %v122 = vld [vmem:[#allocation5 + $0x30] sm:$0xff]
    %v123 = vld [vmem:[#allocation5 + $0x38] sm:$0xff]
    %v124 = vld [vmem:[#allocation5 + $0x40] sm:$0xff]
    %v125 = vld [vmem:[#allocation5 + $0x48] sm:$0xff]
    %v126 = vld [vmem:[#allocation5 + $0x50] sm:$0xff]
    %v127 = vld [vmem:[#allocation5 + $0x58] sm:$0xff]
    %v128 = vld [vmem:[#allocation5 + $0x60] sm:$0xff]
    %v129 = vld [vmem:[#allocation5 + $0x68] sm:$0xff]
    %v130 = vld [vmem:[#allocation5 + $0x70] sm:$0xff]
    %v131 = vld [vmem:[#allocation5 + $0x78] sm:$0xff]
    %v132 = vld [vmem:[#allocation5 + $0x80] sm:$0xff]
    %v133 = vld [vmem:[#allocation5 + $0x88] sm:$0xff]
    %v134 = vld [vmem:[#allocation5 + $0x90] sm:$0xff]
    %v135 = vld [vmem:[#allocation5 + $0x98] sm:$0xff]
    %v136 = vld [vmem:[#allocation5 + $0xa0] sm:$0xff]
    %v137 = vld [vmem:[#allocation5 + $0xa8] sm:$0xff]
    %v138 = vld [vmem:[#allocation5 + $0xb0] sm:$0xff]
    %v139 = vld [vmem:[#allocation5 + $0xb8] sm:$0xff]
    %v140 = vld [vmem:[#allocation5 + $0xc0] sm:$0xff]
    %v141 = vld [vmem:[#allocation5 + $0xc8] sm:$0xff]
    %v142 = vld [vmem:[#allocation5 + $0xd0] sm:$0xff]
    %v143 = vld [vmem:[#allocation5 + $0xd8] sm:$0xff]
    %v144 = vld [vmem:[#allocation5 + $0xe0] sm:$0xff]
    %v145 = vld [vmem:[#allocation5 + $0xe8] sm:$0xff]
    %v146 = vld [vmem:[#allocation5 + $0xf0] sm:$0xff]
    %v147 = vld [vmem:[#allocation5 + $0xf8] sm:$0xff]
    %v148 = vld [vmem:[#allocation5 + $0x100] sm:$0xff]
    %v149 = vld [vmem:[#allocation5 + $0x108] sm:$0xff]
    %v150 = vld [vmem:[#allocation5 + $0x110] sm:$0xff]
    %v151 = vld [vmem:[#allocation5 + $0x118] sm:$0xff]
    %v152 = vld [vmem:[#allocation5 + $0x120] sm:$0xff]
    %v153 = vld [vmem:[#allocation5 + $0x128] sm:$0xff]
    %v154 = vld [vmem:[#allocation5 + $0x130] sm:$0xff]
    %v155 = vld [vmem:[#allocation5 + $0x138] sm:$0xff]
    %v156 = vld [vmem:[#allocation5 + $0x140] sm:$0xff]
    %v157 = vld [vmem:[#allocation5 + $0x148] sm:$0xff]
    %v158 = vld [vmem:[#allocation5 + $0x150] sm:$0xff]
    %v159 = vld [vmem:[#allocation5 + $0x158] sm:$0xff]
    %v160 = vld [vmem:[#allocation5 + $0x160] sm:$0xff]
    %v161 = vld [vmem:[#allocation5 + $0x168] sm:$0xff]
    %v162 = vld [vmem:[#allocation5 + $0x170] sm:$0xff]
    %v163 = vld [vmem:[#allocation5 + $0x178] sm:$0xff]
    %v164 = vld [vmem:[#allocation5 + $0x180] sm:$0xff]
    %v165 = vld [vmem:[#allocation5 + $0x188] sm:$0xff]
    %v166 = vld [vmem:[#allocation5 + $0x190] sm:$0xff]
    %v167 = vld [vmem:[#allocation5 + $0x198] sm:$0xff]
    %v168 = vld [vmem:[#allocation5 + $0x1a0] sm:$0xff]
    %v169 = vld [vmem:[#allocation5 + $0x1a8] sm:$0xff]
    %v170 = vld [vmem:[#allocation5 + $0x1b0] sm:$0xff]
    %v171 = vld [vmem:[#allocation5 + $0x1b8] sm:$0xff]
    %v172 = vld [vmem:[#allocation5 + $0x1c0] sm:$0xff]
    %v173 = vld [vmem:[#allocation5 + $0x1c8] sm:$0xff]
    %v174 = vld [vmem:[#allocation5 + $0x1d0] sm:$0xff]
    %v175 = vld [vmem:[#allocation5 + $0x1d8] sm:$0xff]
    %v176 = vld [vmem:[#allocation5 + $0x1e0] sm:$0xff]
    %v177 = vld [vmem:[#allocation5 + $0x1e8] sm:$0xff]
    %v178 = vld [vmem:[#allocation5 + $0x1f0] sm:$0xff]
    %v179 = vld [vmem:[#allocation5 + $0x1f8] sm:$0xff]
    %v180 = vld [vmem:[#allocation5 + $0x200] sm:$0xff]
    %v181 = vld [vmem:[#allocation5 + $0x208] sm:$0xff]
    %v182 = vld [vmem:[#allocation5 + $0x210] sm:$0xff]
    %v183 = vld [vmem:[#allocation5 + $0x218] sm:$0xff]
    %v184 = vld [vmem:[#allocation5 + $0x220] sm:$0xff]
    %v185 = vld [vmem:[#allocation5 + $0x228] sm:$0xff]
    %v186 = vld [vmem:[#allocation5 + $0x230] sm:$0xff]
    %v187 = vld [vmem:[#allocation5 + $0x238] sm:$0xff]
    %v188 = vld [vmem:[#allocation5 + $0x240] sm:$0xff]
    %v189 = vld [vmem:[#allocation5 + $0x248] sm:$0xff]
    %v190 = vld [vmem:[#allocation5 + $0x250] sm:$0xff]
    %v191 = vld [vmem:[#allocation5 + $0x258] sm:$0xff]
    %v192 = vld [vmem:[#allocation5 + $0x260] sm:$0xff]
    %v193 = vld [vmem:[#allocation5 + $0x268] sm:$0xff]
    %v194 = vld [vmem:[#allocation5 + $0x270] sm:$0xff]
    %v195 = vld [vmem:[#allocation5 + $0x278] sm:$0xff]
    %v196 = vld [vmem:[#allocation5 + $0x280] sm:$0xff]
    %v197 = vld [vmem:[#allocation5 + $0x288] sm:$0xff]
    %v198 = vld [vmem:[#allocation5 + $0x290] sm:$0xff]
    %v199 = vld [vmem:[#allocation5 + $0x298] sm:$0xff]
    %v200 = vld [vmem:[#allocation5 + $0x2a0] sm:$0xff]
    %v201 = vld [vmem:[#allocation5 + $0x2a8] sm:$0xff]
    %v202 = vld [vmem:[#allocation5 + $0x2b0] sm:$0xff]
    %v203 = vld [vmem:[#allocation5 + $0x2b8] sm:$0xff]
    %v204 = vld [vmem:[#allocation5 + $0x2c0] sm:$0xff]
    %v205 = vld [vmem:[#allocation5 + $0x2c8] sm:$0xff]
    %v206 = vld [vmem:[#allocation5 + $0x2d0] sm:$0xff]
    %v207 = vld [vmem:[#allocation5 + $0x2d8] sm:$0xff]
    %v208 = vld [vmem:[#allocation5 + $0x2e0] sm:$0xff]
    %v209 = vld [vmem:[#allocation5 + $0x2e8] sm:$0xff]
    %v210 = vld [vmem:[#allocation5 + $0x2f0] sm:$0xff]
    %v211 = vld [vmem:[#allocation5 + $0x2f8] sm:$0xff]
    %v212 = vld [vmem:[#allocation5 + $0x300] sm:$0xff]
    %v213 = vld [vmem:[#allocation5 + $0x308] sm:$0xff]
    %v214 = vld [vmem:[#allocation5 + $0x310] sm:$0xff]
    %v215 = vld [vmem:[#allocation5 + $0x318] sm:$0xff]
    %v216 = vld [vmem:[#allocation5 + $0x320] sm:$0xff]
    %v217 = vld [vmem:[#allocation5 + $0x328] sm:$0xff]
    %v218 = vld [vmem:[#allocation5 + $0x330] sm:$0xff]
    %v219 = vld [vmem:[#allocation5 + $0x338] sm:$0xff]
    %v220 = vld [vmem:[#allocation5 + $0x340] sm:$0xff]
    %v221 = vld [vmem:[#allocation5 + $0x348] sm:$0xff]
    %v222 = vld [vmem:[#allocation5 + $0x350] sm:$0xff]
    %v223 = vld [vmem:[#allocation5 + $0x358] sm:$0xff]
    %v224 = vld [vmem:[#allocation5 + $0x360] sm:$0xff]
    %v225 = vld [vmem:[#allocation5 + $0x368] sm:$0xff]
    %v226 = vld [vmem:[#allocation5 + $0x370] sm:$0xff]
    %v227 = vld [vmem:[#allocation5 + $0x378] sm:$0xff]
    %v228 = vld [vmem:[#allocation5 + $0x380] sm:$0xff]
    %v229 = vld [vmem:[#allocation5 + $0x388] sm:$0xff]
    %v230 = vld [vmem:[#allocation5 + $0x390] sm:$0xff]
    %v231 = vld [vmem:[#allocation5 + $0x398] sm:$0xff]
    %v232 = vld [vmem:[#allocation5 + $0x3a0] sm:$0xff]
    %v233 = vld [vmem:[#allocation5 + $0x3a8] sm:$0xff]
    %v234 = vld [vmem:[#allocation5 + $0x3b0] sm:$0xff]
    %v235 = vld [vmem:[#allocation5 + $0x3b8] sm:$0xff]
    %v236 = vld [vmem:[#allocation5 + $0x3c0] sm:$0xff]
    %v237 = vld [vmem:[#allocation5 + $0x3c8] sm:$0xff]
    %v238 = vld [vmem:[#allocation5 + $0x3d0] sm:$0xff]
    %v239 = vld [vmem:[#allocation5 + $0x3d8] sm:$0xff]
    %v240 = vld [vmem:[#allocation5 + $0x3e0] sm:$0xff]
    %v241 = vld [vmem:[#allocation5 + $0x3e8] sm:$0xff]
    %v242 = vld [vmem:[#allocation5 + $0x3f0] sm:$0xff]
    %v243 = vld [vmem:[#allocation5 + $0x3f8] sm:$0xff]
    %v244 = vld [vmem:[%s2] sm:$0x3]
    %v246 = vlaneseq
    %v247 = vshrl.u32 %v246, 7
    %v248 = vsub.s32 0, %v247
    %v249 = vrot.slane %v244, %v248
    %v250 = vlaneseq
    %v251 = vshrl.u32 %v250, 7
    %v252 = vsub.s32 1, %v251
    %v253 = vrot.slane %v244, %v252
    %vm264 = vcmask 1041409
    %v265 = vsel %vm264, %v94, %v66
    %v266 = vsel %vm264, %v101, %v73
    %v267 = vsel %vm264, %v108, %v80
    %v268 = vsel %vm264, %v115, %v87
    %273 = vmatprep.subr.mxu0 %v117
    %274 = vmatpush1.msra.mxu0 %v116
    %275 = vmatprep.subr.mxu0 %v119
    %276 = vmatpush1.msra.mxu0 %v118
    %277 = vmatprep.subr.mxu0 %v121
    %278 = vmatpush1.msra.mxu0 %v120
    %279 = vmatprep.subr.mxu0 %v123
    %280 = vmatpush1.msra.mxu0 %v122
    %281 = vmatprep.subr.mxu0 %v125
    %282 = vmatpush1.msra.mxu0 %v124
    %283 = vmatprep.subr.mxu0 %v127
    %284 = vmatpush1.msra.mxu0 %v126
    %285 = vmatprep.subr.mxu0 %v129
    %286 = vmatpush1.msra.mxu0 %v128
    %287 = vmatprep.subr.mxu0 %v131
    %288 = vmatpush1.msra.mxu0 %v130
    %289 = vmatprep.subr.mxu0 %v133
    %290 = vmatpush1.msra.mxu0 %v132
    %291 = vmatprep.subr.mxu0 %v135
    %292 = vmatpush1.msra.mxu0 %v134
    %293 = vmatprep.subr.mxu0 %v137
    %294 = vmatpush1.msra.mxu0 %v136
    %295 = vmatprep.subr.mxu0 %v139
    %296 = vmatpush1.msra.mxu0 %v138
    %297 = vmatprep.subr.mxu0 %v141
    %298 = vmatpush1.msra.mxu0 %v140
    %299 = vmatprep.subr.mxu0 %v143
    %300 = vmatpush1.msra.mxu0 %v142
    %301 = vmatprep.subr.mxu0 %v145
    %302 = vmatpush1.msra.mxu0 %v144
    %303 = vmatprep.subr.mxu0 %v147
    %304 = vmatpush1.msra.mxu0 %v146
    %305 = vmatprep.subr.mxu0 %v149
    %306 = vmatpush1.msra.mxu0 %v148
    %307 = vmatprep.subr.mxu0 %v151
    %308 = vmatpush1.msra.mxu0 %v150
    %309 = vmatprep.subr.mxu0 %v153
    %310 = vmatpush1.msra.mxu0 %v152
    %311 = vmatprep.subr.mxu0 %v155
    %312 = vmatpush1.msra.mxu0 %v154
    %313 = vmatprep.subr.mxu0 %v157
    %314 = vmatpush1.msra.mxu0 %v156
    %315 = vmatprep.subr.mxu0 %v159
    %316 = vmatpush1.msra.mxu0 %v158
    %317 = vmatprep.subr.mxu0 %v161
    %318 = vmatpush1.msra.mxu0 %v160
    %319 = vmatprep.subr.mxu0 %v163
    %320 = vmatpush1.msra.mxu0 %v162
    %321 = vmatprep.subr.mxu0 %v165
    %322 = vmatpush1.msra.mxu0 %v164
    %323 = vmatprep.subr.mxu0 %v167
    %324 = vmatpush1.msra.mxu0 %v166
    %325 = vmatprep.subr.mxu0 %v169
    %326 = vmatpush1.msra.mxu0 %v168
    %327 = vmatprep.subr.mxu0 %v171
    %328 = vmatpush1.msra.mxu0 %v170
    %329 = vmatprep.subr.mxu0 %v173
    %330 = vmatpush1.msra.mxu0 %v172
    %331 = vmatprep.subr.mxu0 %v175
    %332 = vmatpush1.msra.mxu0 %v174
    %333 = vmatprep.subr.mxu0 %v177
    %334 = vmatpush1.msra.mxu0 %v176
    %335 = vmatprep.subr.mxu0 %v179
    %336 = vmatpush1.msra.mxu0 %v178
    %337 = vmatprep.mubr.f32.mxu0 %v266
    %338 = vmatmul.mubr.f32.gmra.mrb[0].mxu0 %v265
    %v339 = vpop.f32.mrb[0].mxu0
    %v340 = vadd.f32 %v249, %v339
    %v341 = vpop.f32.mrb[0].mxu0
    %v342 = vadd.f32 %v253, %v341
    %343 = vdwg.mxu0
    %344 = vmatprep.subr.mxu0 %v181
    %345 = vmatpush1.msra.mxu0 %v180
    %346 = vmatprep.subr.mxu0 %v183
    %347 = vmatpush1.msra.mxu0 %v182
    %348 = vmatprep.subr.mxu0 %v185
    %349 = vmatpush1.msra.mxu0 %v184
    %350 = vmatprep.subr.mxu0 %v187
    %351 = vmatpush1.msra.mxu0 %v186
    %352 = vmatprep.subr.mxu0 %v189
    %353 = vmatpush1.msra.mxu0 %v188
    %354 = vmatprep.subr.mxu0 %v191
    %355 = vmatpush1.msra.mxu0 %v190
    %356 = vmatprep.subr.mxu0 %v193
    %357 = vmatpush1.msra.mxu0 %v192
    %358 = vmatprep.subr.mxu0 %v195
    %359 = vmatpush1.msra.mxu0 %v194
    %360 = vmatprep.subr.mxu0 %v197
    %361 = vmatpush1.msra.mxu0 %v196
    %362 = vmatprep.subr.mxu0 %v199
    %363 = vmatpush1.msra.mxu0 %v198
    %364 = vmatprep.subr.mxu0 %v201
    %365 = vmatpush1.msra.mxu0 %v200
    %366 = vmatprep.subr.mxu0 %v203
    %367 = vmatpush1.msra.mxu0 %v202
    %368 = vmatprep.subr.mxu0 %v205
    %369 = vmatpush1.msra.mxu0 %v204
    %370 = vmatprep.subr.mxu0 %v207
    %371 = vmatpush1.msra.mxu0 %v206
    %372 = vmatprep.subr.mxu0 %v209
    %373 = vmatpush1.msra.mxu0 %v208
    %374 = vmatprep.subr.mxu0 %v211
    %375 = vmatpush1.msra.mxu0 %v210
    %376 = vmatprep.subr.mxu0 %v213
    %377 = vmatpush1.msra.mxu0 %v212
    %378 = vmatprep.subr.mxu0 %v215
    %379 = vmatpush1.msra.mxu0 %v214
    %380 = vmatprep.subr.mxu0 %v217
    %381 = vmatpush1.msra.mxu0 %v216
    %382 = vmatprep.subr.mxu0 %v219
    %383 = vmatpush1.msra.mxu0 %v218
    %384 = vmatprep.subr.mxu0 %v221
    %385 = vmatpush1.msra.mxu0 %v220
    %386 = vmatprep.subr.mxu0 %v223
    %387 = vmatpush1.msra.mxu0 %v222
    %388 = vmatprep.subr.mxu0 %v225
    %389 = vmatpush1.msra.mxu0 %v224
    %390 = vmatprep.subr.mxu0 %v227
    %391 = vmatpush1.msra.mxu0 %v226
    %392 = vmatprep.subr.mxu0 %v229
    %393 = vmatpush1.msra.mxu0 %v228
    %394 = vmatprep.subr.mxu0 %v231
    %395 = vmatpush1.msra.mxu0 %v230
    %396 = vmatprep.subr.mxu0 %v233
    %397 = vmatpush1.msra.mxu0 %v232
    %398 = vmatprep.subr.mxu0 %v235
    %399 = vmatpush1.msra.mxu0 %v234
    %400 = vmatprep.subr.mxu0 %v237
    %401 = vmatpush1.msra.mxu0 %v236
    %402 = vmatprep.subr.mxu0 %v239
    %403 = vmatpush1.msra.mxu0 %v238
    %404 = vmatprep.subr.mxu0 %v241
    %405 = vmatpush1.msra.mxu0 %v240
    %406 = vmatprep.subr.mxu0 %v243
    %407 = vmatpush1.msra.mxu0 %v242
    %408 = vmatprep.mubr.f32.mxu0 %v268
    %409 = vmatmul.mubr.f32.gmra.mrb[0].mxu0 %v267
    %v410 = vpop.f32.mrb[0].mxu0
    %v411 = vadd.f32 %v340, %v410
    %v412 = vpop.f32.mrb[0].mxu0
    %v413 = vadd.f32 %v342, %v412
    %414 = vdwg.mxu0
    %v417 = vcombine.low %v411, %v413
    %v419 = vunpack.c.l.s4 1983009808
    %v420 = vunpack.c.0.s8 %v419
    %v421 = vlaneseq
    %v422 = vshrl.u32 %v421, 7
    %v423 = vsub.s32 %v420, %v422
    %v424 = vrot.slane %v417, %v423
    %426 = vst [vmem:[#allocation7] sm:$0xf] %v424
    // Predicated region
    $region22: #{tpu_custom_call.1} parent=1 // pred_check
      _
    $region23: #{tpu_custom_call.1} parent=1 // pred_check_branch
      %428 = sbr.rel (0) target = $region25
    $region24: #{tpu_custom_call.1} parent=1 // pred_region
      %s430 = ssub.s32 64, 64
      %431 = vsyncadd [#allocation4], %s430
      %s433 = sshll.u32 [#allocation7], 4
      %s434 = int_to_ptr.vmem [resolvable:$true] %s433
      %436 = dma.vmem_to_hbm [thread:$0]  %s434, 64, %s3, [#allocation4]
    $region25: #{tpu_custom_call.1} parent=1 // pred_fallthru
      _
    // Predicated region
    $region26: #{tpu_custom_call.1} parent=1 // pred_check
      _
    $region27: #{tpu_custom_call.1} parent=1 // pred_check_branch
      %438 = sbr.rel (0) target = $region29
    $region28: #{tpu_custom_call.1} parent=1 // pred_region
      %439 = dma.done [#allocation4], 64
    $region29: #{tpu_custom_call.1} parent=1 // pred_fallthru
      _
    %440 = vsyncpa [#allocation3], 1
    %441 = vsyncpa [#allocation6], 1
    %442 = vsyncpa [#allocation4], 1

</llo_original>
